<compile_context>
chip_gen: v7x
topology: tpu7x:2x2x1
jax: 0.10.0
libtpu: 0.0.40
codegen_flags: <defaults>
</compile_context>

<pallas_src>
import functools
import math

import jax
import jax.numpy as jnp
from jax import lax
from jax.experimental import pallas as pl
from jax.experimental.pallas import tpu as pltpu


def _round_up(a, b):
    return ((a + b - 1) // b) * b


# --------------------------------------------------------------------------- #
# out = gamma + x  (everything the PyTorch forward actually returns)
# --------------------------------------------------------------------------- #
def _add_gamma_kernel(gamma_ref, x_ref, out_ref):
    # gamma_ref: (1,) f32 scalar in SMEM; x_ref / out_ref: (row_tile, lanes) tiles.
    # gamma is kept in f32 (like the PyTorch parameter); result cast to x's dtype.
    out_ref[...] = (x_ref[...] + gamma_ref[0]).astype(out_ref.dtype)


def gamma_add(x, gamma, *, target_block_bytes=4 << 20):
    """out = gamma + x, with x viewed as a lane-dense (rows, lanes) 2-D array."""
    orig_shape = x.shape
    total = math.prod(orig_shape)
    itemsize = jnp.dtype(x.dtype).itemsize

    # Pick a lane width (multiple of 128) that divides the element count so no
    # host-side pad / slice (each an extra full HBM pass of x) is needed.
    lanes = None
    for cand in (2048, 1024, 512, 256, 128):
        if total % cand == 0:
            lanes = cand
            break
    if lanes is None:
        # TODO(synk): element count not a multiple of 128 -> fall back to pad+slice
        # (could instead mask the tail tile in-kernel).
        lanes = 1024
        padded_total = _round_up(total, lanes)
        x2d = jnp.pad(x.reshape(-1), (0, padded_total - total)).reshape(-1, lanes)
    else:
        padded_total = total
        x2d = x.reshape(-1, lanes)

    rows = padded_total // lanes
    # ~4 MiB blocks: in + out, double-buffered => ~16 MiB VMEM (fits v5e/v6e/v7x).
    row_tile = max(8, target_block_bytes // (lanes * itemsize))
    row_tile = min(row_tile, rows)

    gamma_s = gamma.reshape(1).astype(jnp.float32)

    out2d = pl.pallas_call(
        _add_gamma_kernel,
        out_shape=jax.ShapeDtypeStruct((rows, lanes), x.dtype),
        grid_spec=pltpu.PrefetchScalarGridSpec(
            num_scalar_prefetch=0,
            grid=(pl.cdiv(rows, row_tile),),
            in_specs=[
                pl.BlockSpec(memory_space=pltpu.MemorySpace.SMEM),   # gamma scalar
                pl.BlockSpec((row_tile, lanes), lambda r: (r, 0)),   # x tile
            ],
            out_specs=pl.BlockSpec((row_tile, lanes), lambda r: (r, 0)),
        ),
        compiler_params=pltpu.CompilerParams(dimension_semantics=("parallel",)),
        cost_estimate=pl.CostEstimate(
            flops=padded_total,
            transcendentals=0,
            bytes_accessed=2 * padded_total * itemsize),
    )(gamma_s, x2d)

    if padded_total != total:
        return out2d.reshape(-1)[:total].reshape(orig_shape)
    return out2d.reshape(orig_shape)


# --------------------------------------------------------------------------- #
# Optional (gated) energy path: energy = (Wq x + bq)^T @ (Wk x + bk)
# --------------------------------------------------------------------------- #
def _project_kernel(x_ref, w_ref, b_ref, q_ref, k_ref):
    # x_ref: (1, C, T) native-dtype column slab.  w_ref: (2*Cqp, C) bf16 fused Wq|Wk.
    # b_ref: (2*Cqp, 1) f32 fused bias.  q_ref / k_ref: (1, Cqp, T) bf16 outputs.
    cqp = q_ref.shape[1]
    x_bf = x_ref[0].astype(jnp.bfloat16)
    proj = jnp.dot(w_ref[...], x_bf, preferred_element_type=jnp.float32) + b_ref[...]
    # Split on a sublane-aligned boundary (Cqp is a multiple of 8).
    q_ref[0] = proj[:cqp].astype(q_ref.dtype)
    k_ref[0] = proj[cqp:].astype(k_ref.dtype)


def _energy_kernel(q_ref, k_ref, energy_ref):
    # q_ref: (1, Cqp, TM) bf16, k_ref: (1, Cqp, TN) bf16 -> energy tile (TM, TN).
    # Contract the channel axis of both operands directly (no explicit q transpose);
    # accumulation stays f32, output cast to the (configurable) energy dtype.
    e = lax.dot_general(q_ref[0], k_ref[0], (((0,), (0,)), ((), ())),
                        preferred_element_type=jnp.float32)
    energy_ref[0] = e.astype(energy_ref.dtype)


def _pick_tile(n, t_max):
    # Largest multiple of 128 that divides n (n itself a multiple of 128), <= t_max.
    best, cand = 128, 128
    while cand <= min(n, t_max):
        if n % cand == 0:
            best = cand
        cand += 128
    return best


def attention_energy(x, wq, bq, wk, bk, *, tile=None, energy_dtype=jnp.bfloat16,
                     vmem_limit_bytes=None):
    """energy[b, m, n] = (Wq x + bq)[b, :, m] . (Wk x + bk)[b, :, n]   -> (B, N, N)."""
    B, C, W, H = x.shape
    N = W * H
    Cq = wq.shape[0]
    cqp = _round_up(max(Cq, 1), 8)          # sublane-aligned channel count

    # Tile: multiple of 128 dividing the (possibly padded) spatial length.
    # Default <= 1024: with bf16 energy the output block is 2 MiB (double-buffered
    # 4 MiB) + tiny q/k tiles -> fits every generation incl. v7x.  On v5e/v6e
    # (128 MiB VMEM) pass tile=2048 and a raised vmem_limit_bytes for fewer, bigger
    # grid steps.  The pass is HBM-store bound (intensity ~Cq/2 flops/byte).
    t_max = 1024 if tile is None else tile
    n_eff = N if N % 128 == 0 else _round_up(N, 128)
    t = _pick_tile(n_eff, t_max)
    n_t = n_eff // t

    x_flat = x.reshape(B, C, N)
    if n_eff != N:
        # TODO(synk): lane-unaligned N -> pad columns and slice the energy afterwards
        # (padded q/k columns hold the bias, so the final slice is load-bearing).
        x_flat = jnp.pad(x_flat, ((0, 0), (0, 0), (0, n_eff - N)))

    # Fuse the two 1x1-conv projections; pad each half to a sublane boundary so the
    # in-kernel split proj[:cqp] / proj[cqp:] lands on an (8, 128) tile edge.  The
    # zero-padded channels contribute exactly 0 to the energy contraction.
    w = jnp.zeros((2 * cqp, C), jnp.bfloat16)
    w = w.at[:Cq].set(wq.astype(jnp.bfloat16))
    w = w.at[cqp:cqp + Cq].set(wk.astype(jnp.bfloat16))
    b = jnp.zeros((2 * cqp, 1), jnp.float32)
    b = b.at[:Cq, 0].set(bq.astype(jnp.float32))
    b = b.at[cqp:cqp + Cq, 0].set(bk.astype(jnp.float32))

    # Pass 1: q/k projection (bf16 out), tiled over spatial columns.
    q, k = pl.pallas_call(
        _project_kernel,
        out_shape=(jax.ShapeDtypeStruct((B, cqp, n_eff), jnp.bfloat16),
                   jax.ShapeDtypeStruct((B, cqp, n_eff), jnp.bfloat16)),
        grid_spec=pltpu.PrefetchScalarGridSpec(
            num_scalar_prefetch=0,
            grid=(B, n_t),
            in_specs=[
                pl.BlockSpec((1, C, t), lambda bb, c: (bb, 0, c)),        # x column slab
                pl.BlockSpec((2 * cqp, C), lambda bb, c: (0, 0)),         # fused Wq|Wk
                pl.BlockSpec((2 * cqp, 1), lambda bb, c: (0, 0)),         # fused bias
            ],
            out_specs=[
                pl.BlockSpec((1, cqp, t), lambda bb, c: (bb, 0, c)),
                pl.BlockSpec((1, cqp, t), lambda bb, c: (bb, 0, c)),
            ],
        ),
        compiler_params=pltpu.CompilerParams(
            dimension_semantics=("parallel", "parallel"),
            vmem_limit_bytes=vmem_limit_bytes),
        cost_estimate=pl.CostEstimate(
            flops=2 * B * (2 * cqp) * C * n_eff,
            transcendentals=0,
            bytes_accessed=B * n_eff * (C * jnp.dtype(x.dtype).itemsize + 2 * cqp * 2)),
    )(x_flat, w, b)

    # Pass 2: energy = q^T @ k, tiled (t, t) over the (N, N) output.
    energy = pl.pallas_call(
        _energy_kernel,
        out_shape=jax.ShapeDtypeStruct((B, n_eff, n_eff), energy_dtype),
        grid_spec=pltpu.PrefetchScalarGridSpec(
            num_scalar_prefetch=0,
            grid=(B, n_t, n_t),
            in_specs=[
                pl.BlockSpec((1, cqp, t), lambda bb, i, j: (bb, 0, i)),   # q row block
                pl.BlockSpec((1, cqp, t), lambda bb, i, j: (bb, 0, j)),   # k col block
            ],
            out_specs=pl.BlockSpec((1, t, t), lambda bb, i, j: (bb, i, j)),
        ),
        compiler_params=pltpu.CompilerParams(
            dimension_semantics=("parallel", "parallel", "parallel"),
            vmem_limit_bytes=vmem_limit_bytes),
        cost_estimate=pl.CostEstimate(
            flops=2 * B * n_eff * n_eff * cqp,
            transcendentals=0,
            bytes_accessed=B * (2 * cqp * n_eff * n_t * 2
                                + n_eff * n_eff * jnp.dtype(energy_dtype).itemsize)),
    )(q, k)

    if n_eff != N:
        energy = energy[:, :N, :N]
    return energy


# --------------------------------------------------------------------------- #
# Module forward
# --------------------------------------------------------------------------- #
def self_attention_forward(x, wq, bq, wk, bk, gamma, compute_energy=False,
                           energy_tile=None, energy_dtype=jnp.bfloat16,
                           vmem_limit_bytes=None):
    """Faithful forward: returns out = gamma + x (exactly what the PyTorch module
    returns).  compute_energy=True additionally returns the (otherwise dead)
    energy intermediate as (out, energy)."""
    out = gamma_add(x, gamma)
    if not compute_energy:
        return out
    energy = attention_energy(x, wq, bq, wk, bk, tile=energy_tile,
                              energy_dtype=energy_dtype,
                              vmem_limit_bytes=vmem_limit_bytes)
    return out, energy


if __name__ == "__main__":
    # Shapes consistent with the module: in_dim must be >= 8 (in_dim // 8 >= 1).
    # W*H = 256 keeps the spatial length lane-aligned (exercises the no-pad path).
    B, C, W, H = 2, 16, 16, 16
    Cq = C // 8
    N = W * H

    key = jax.random.PRNGKey(0)
    kx, kwq, kbq, kwk, kbk = jax.random.split(key, 5)

    x = jax.random.normal(kx, (B, C, W, H), dtype=jnp.float32)
    # Conv2d(in_dim, in_dim // 8, 1) weights flattened (Cq, C, 1, 1) -> (Cq, C).
    wq = jax.random.normal(kwq, (Cq, C), dtype=jnp.float32) * 0.1
    bq = jax.random.normal(kbq, (Cq,), dtype=jnp.float32) * 0.1
    # TODO(synk): key_conv is used in the PyTorch forward but never defined in
    # __init__; explicit weights are supplied for it here.
    wk = jax.random.normal(kwk, (Cq, C), dtype=jnp.float32) * 0.1
    bk = jax.random.normal(kbk, (Cq,), dtype=jnp.float32) * 0.1
    # PyTorch initializes gamma to zeros; use a nonzero value so the add is exercised.
    gamma = jnp.full((1,), 0.25, dtype=jnp.float32)

    # Default path: exactly the module's forward output.
    fwd = jax.jit(self_attention_forward)
    out = jax.block_until_ready(fwd(x, wq, bq, wk, bk, gamma))

    # Gated path: also produce the energy intermediate (tiled kernels).
    fwd_e = jax.jit(functools.partial(self_attention_forward, compute_energy=True))
    out2, energy = fwd_e(x, wq, bq, wk, bk, gamma)
    out2 = jax.block_until_ready(out2)
    energy = jax.block_until_ready(energy)

    # Plain-JAX reference (bf16-rounded inputs mirror the kernel's bf16 MXU path).
    hi = lax.Precision.HIGHEST
    bf = lambda a: a.astype(jnp.bfloat16).astype(jnp.float32)
    x_flat = x.reshape(B, C, N)
    q_ref = bf(jnp.einsum("qc,bcn->bqn", bf(wq), bf(x_flat), precision=hi)
               + bq[None, :, None])
    k_ref = bf(jnp.einsum("qc,bcn->bqn", bf(wk), bf(x_flat), precision=hi)
               + bk[None, :, None])
    energy_ref = jnp.einsum("bqm,bqn->bmn", q_ref, k_ref, precision=hi)
    out_ref = gamma[0] + x

    assert out.shape == (B, C, W, H)
    assert energy.shape == (B, N, N)
    assert jnp.allclose(out, out_ref, atol=1e-6)
    assert jnp.allclose(out2, out_ref, atol=1e-6)
    assert jnp.allclose(energy.astype(jnp.float32), energy_ref, atol=5e-2, rtol=5e-2)

    print("KERNEL_OK")
</pallas_src>

<mosaic_0001>
module attributes {stable_mosaic.version = 11 : i64} {
  func.func @_add_gamma_kernel(%arg0: i32, %arg1: memref<1xf32, #tpu.memory_space<smem>>, %arg2: memref<4x2048xf32, #tpu.memory_space<vmem>>, %arg3: memref<4x2048xf32, #tpu.memory_space<vmem>>) attributes {dimension_semantics = [#tpu.dimension_semantics<parallel>], iteration_bounds = array<i64: 1>, scalar_prefetch = 0 : i64, scratch_operands = 0 : i64, tpu.core_type = #tpu.core_type<tc>, window_params = [{transform_indices = @transform_0, window_bounds = array<i64: 1>}, {transform_indices = @transform_1, window_bounds = array<i64: 4, 2048>}, {transform_indices = @transform_2, window_bounds = array<i64: 4, 2048>}]} {
    %c0 = arith.constant 0 : index
    %c0_0 = arith.constant 0 : index
    %0 = vector.load %arg2[%c0, %c0_0] : memref<4x2048xf32, #tpu.memory_space<vmem>>, vector<4x2048xf32>
    %c0_1 = arith.constant 0 : index
    %1 = memref.load %arg1[%c0_1] : memref<1xf32, #tpu.memory_space<smem>>
    %2 = vector.broadcast %1 : f32 to vector<4x2048xf32>
    %3 = arith.addf %0, %2 : vector<4x2048xf32>
    %c0_2 = arith.constant 0 : index
    %c0_3 = arith.constant 0 : index
    %4 = vector.load %arg3[%c0_2, %c0_3] : memref<4x2048xf32, #tpu.memory_space<vmem>>, vector<4x2048xf32>
    tpu.vector_store %arg3[%c0_2, %c0_3], %3 {strides = array<i32>} : memref<4x2048xf32, #tpu.memory_space<vmem>>, vector<4x2048xf32>,
    return
  }
  func.func @transform_0(%arg0: i32) -> i32 {
    %c0_i32 = arith.constant 0 : i32
    %c0_i32_0 = arith.constant 0 : i32
    return %c0_i32 : i32
  }
  func.func @transform_1(%arg0: i32) -> (i32, i32) {
    %c0_i32 = arith.constant 0 : i32
    %c0_i32_0 = arith.constant 0 : i32
    return %arg0, %c0_i32 : i32, i32
  }
  func.func @transform_2(%arg0: i32) -> (i32, i32) {
    %c0_i32 = arith.constant 0 : i32
    %c0_i32_0 = arith.constant 0 : i32
    return %arg0, %c0_i32 : i32, i32
  }
}

</mosaic_0001>

<llo_original>
// kernel: self_attention_forward.1
$region0: #{self_attention_forward.1}
  #allocation0 [shape = 'u32[]', space=smem, size = 0x4, offset = 0x4, fixed_abs, tag = 'smem constant byte address 0x4 - core index']
  #allocation1 [shape = 'u32[144,128]{1,0:T(1,128)}', space=vmem, size = 0x12000, scoped, tag = 'internal scratch']
  #allocation2 [shape = 'f32[1]{0:T(128)S(6)}', space=smem, size = 0x200, scoped, tag = 'scoped memory for self_attention_forward.1']
  %s0 = inlined_call_operand.<no memory space> [shape: f32[1], index: 0, kind: input, shape index: {}]
  %s1 = inlined_call_operand.vmem [shape: f32[4,2048], index: 1, kind: input, shape index: {}]
  %s2 = inlined_call_operand.vmem [shape: f32[4,2048], index: 2, kind: output, shape index: {}]
  %s3 = sld [smem:[#allocation0]]
  $region18: #{self_attention_forward.1} parent=0
    _
  %s5 = ssub.s32 1, %s3
  %s6 = scalar_select 0, %s5, %s3
  %7 = sst [smem:[#allocation2]] %s0
  // Predicated region
  $region2: #{self_attention_forward.1} parent=0 // pred_check
    _
  $region3: #{self_attention_forward.1} parent=0 // pred_check_branch
    %9 = sbr.rel (0) target = $region5
  $region4: #{self_attention_forward.1} parent=0 // pred_region
    _
  $region5: #{self_attention_forward.1} parent=0 // pred_fallthru
    _
  // Predicated region
  $region6: #{self_attention_forward.1} parent=0 // pred_check
    _
  $region7: #{self_attention_forward.1} parent=0 // pred_check_branch
    %11 = sbr.rel (0) target = $region9
  $region8: #{self_attention_forward.1} parent=0 // pred_region
    _
  $region9: #{self_attention_forward.1} parent=0 // pred_fallthru
    _
  %v12 = vld [vmem:[%s1] sm:$0xff]
  %v13 = vld [vmem:[%s1 + $0x8] sm:$0xff]
  %v14 = vld [vmem:[%s1 + $0x10] sm:$0xff]
  %v15 = vld [vmem:[%s1 + $0x18] sm:$0xff]
  %v16 = vld [vmem:[%s1 + $0x20] sm:$0xff]
  %v17 = vld [vmem:[%s1 + $0x28] sm:$0xff]
  %v18 = vld [vmem:[%s1 + $0x30] sm:$0xff]
  %v19 = vld [vmem:[%s1 + $0x38] sm:$0xff]
  %s20 = sld [smem:[#allocation2]]
  %v21 = vstv %s20
  %v22 = vadd.f32 %v12, %v21
  %v23 = vadd.f32 %v13, %v21
  %v24 = vadd.f32 %v14, %v21
  %v25 = vadd.f32 %v15, %v21
  %v26 = vadd.f32 %v16, %v21
  %v27 = vadd.f32 %v17, %v21
  %v28 = vadd.f32 %v18, %v21
  %v29 = vadd.f32 %v19, %v21
  %30 = vst [vmem:[%s2] sm:$0xff] %v22
  %31 = vst [vmem:[%s2 + $0x8] sm:$0xff] %v23
  %32 = vst [vmem:[%s2 + $0x10] sm:$0xff] %v24
  %33 = vst [vmem:[%s2 + $0x18] sm:$0xff] %v25
  %34 = vst [vmem:[%s2 + $0x20] sm:$0xff] %v26
  %35 = vst [vmem:[%s2 + $0x28] sm:$0xff] %v27
  %36 = vst [vmem:[%s2 + $0x30] sm:$0xff] %v28
  %37 = vst [vmem:[%s2 + $0x38] sm:$0xff] %v29
  // Predicated region
  $region10: #{self_attention_forward.1} parent=0 // pred_check
    _
  $region11: #{self_attention_forward.1} parent=0 // pred_check_branch
    %39 = sbr.rel (0) target = $region13
  $region12: #{self_attention_forward.1} parent=0 // pred_region
    _
  $region13: #{self_attention_forward.1} parent=0 // pred_fallthru
    _
  // Predicated region
  $region14: #{self_attention_forward.1} parent=0 // pred_check
    _
  $region15: #{self_attention_forward.1} parent=0 // pred_check_branch
    %41 = sbr.rel (0) target = $region17
  $region16: #{self_attention_forward.1} parent=0 // pred_region
    _
  $region17: #{self_attention_forward.1} parent=0 // pred_fallthru
    _

</llo_original>
